<compile_context>
chip_gen: v6e
topology: v6e:2x2x1
jax: 0.10.0
libtpu: 0.0.40
codegen_flags: <defaults>
</compile_context>

<pallas_src>
import jax
import jax.numpy as jnp
from jax.experimental import pallas as pl
from jax.experimental.pallas import tpu as pltpu

I_DIM = 320                       # input features
H1 = (I_DIM + 8) // 2             # 164
H2 = (I_DIM + 3 * 8) // 4         # 86
O_DIM = 8                         # output features

# Hardware-friendly padded hidden widths (lane = 128).
H1_PAD = 256
H2_PAD = 128


def _round_up(n, m):
    return ((n + m - 1) // m) * m


def _pad_to(a, shape):
    pads = [(0, s - d) for d, s in zip(a.shape, shape)]
    return jnp.pad(a, pads)


def _pick_tile_b(B):
    """Batch tile: multiple of 16, bounded padding waste, >=2 steps for mid batches."""
    B16 = _round_up(max(B, 1), 16)
    if B16 <= 256:
        return B16                       # small batch: single tile, no padding waste
    # Prefer 256 for mid-size batches (>=2 grid steps per v7x core, pipeline overlap);
    # prefer 512 only once the batch is large enough that per-step overhead matters.
    order = (512, 256, 128) if B16 >= 8192 else (256, 512, 128)
    best_t, best_pad = None, None
    for t in order:
        pad = _round_up(B16, t)
        if best_pad is None or pad < best_pad:
            best_t, best_pad = t, pad
    return best_t


def prepare_params(w1, b1, w2, b2, w3, b3):
    """Pad + cast parameters ONCE (call at init / param-prep time, not per forward).

    w_k are stored transposed (in, out); b_k are (1, out).  Padded rows/cols and bias
    entries are zero, and ReLU(0)=0, so the real 8 outputs are exact w.r.t. the
    padded math."""
    w1_p = _pad_to(w1, (I_DIM, H1_PAD)).astype(jnp.bfloat16)
    b1_p = _pad_to(b1, (1, H1_PAD)).astype(jnp.float32)
    w2_p = _pad_to(w2, (H1_PAD, H2_PAD)).astype(jnp.bfloat16)
    b2_p = _pad_to(b2, (1, H2_PAD)).astype(jnp.float32)
    # Output layer: pad only the *input* dim; keep the true 8-wide output so the
    # kernel writes only the real columns.
    w3_p = _pad_to(w3, (H2_PAD, O_DIM)).astype(jnp.bfloat16)
    b3_p = b3.astype(jnp.float32)
    return (w1_p, b1_p, w2_p, b2_p, w3_p, b3_p)


def mlp_kernel(x_ref, w1_ref, b1_ref, w2_ref, b2_ref, w3_ref, b3_ref, o_ref):
    # Cast x f32 -> bf16 in-kernel (free on the VPU; halves x HBM traffic vs a
    # separate wrapper cast pass).
    x = x_ref[...].astype(jnp.bfloat16)
    # fc1 + relu  (bf16 x bf16 -> f32 accumulation on the MXU)
    h1 = jnp.dot(x, w1_ref[...], preferred_element_type=jnp.float32)
    h1 = jnp.maximum(h1 + b1_ref[...], 0.0).astype(jnp.bfloat16)
    # fc2 + relu
    h2 = jnp.dot(h1, w2_ref[...], preferred_element_type=jnp.float32)
    h2 = jnp.maximum(h2 + b2_ref[...], 0.0).astype(jnp.bfloat16)
    # out: only the real 8 output columns are computed and stored.
    o = jnp.dot(h2, w3_ref[...], preferred_element_type=jnp.float32)
    o_ref[...] = (o + b3_ref[...]).astype(o_ref.dtype)


def mlp_forward(x, params, *, tile_b=None):
    """x: (B, 320) f32.  params: output of prepare_params()."""
    w1_p, b1_p, w2_p, b2_p, w3_p, b3_p = params
    B, I = x.shape
    assert I == I_DIM

    if tile_b is None:
        tile_b = _pick_tile_b(B)
    B_pad = _round_up(max(B, 1), tile_b)

    # Only batch-pad x (zeros); dtype stays f32 — the kernel casts.
    x_p = x if B_pad == B else jnp.pad(x, ((0, B_pad - B), (0, 0)))

    grid = (B_pad // tile_b,)
    const = lambda shape: pl.BlockSpec(shape, lambda i: (0, 0))  # resident in VMEM

    out = pl.pallas_call(
        mlp_kernel,
        out_shape=jax.ShapeDtypeStruct((B_pad, O_DIM), jnp.float32),
        grid=grid,
        in_specs=[
            pl.BlockSpec((tile_b, I_DIM), lambda i: (i, 0)),   # x: tiled over batch
            const((I_DIM, H1_PAD)), const((1, H1_PAD)),
            const((H1_PAD, H2_PAD)), const((1, H2_PAD)),
            const((H2_PAD, O_DIM)), const((1, O_DIM)),
        ],
        out_specs=pl.BlockSpec((tile_b, O_DIM), lambda i: (i, 0)),
        compiler_params=pltpu.CompilerParams(
            # On v7x, pltpu.CORE_PARALLEL here would guarantee both TensorCores
            # split the batch axis; "parallel" is the portable choice.
            dimension_semantics=("parallel",),
        ),
    )(x_p, w1_p, b1_p, w2_p, b2_p, w3_p, b3_p)

    return out[:B]


def init_linear(key, in_f, out_f):
    # Deterministic init mimicking torch.nn.Linear default (uniform +-1/sqrt(in_f)).
    kw, kb = jax.random.split(key)
    bound = 1.0 / jnp.sqrt(in_f)
    # Store transposed: (in_f, out_f) for y = x @ W + b
    w = jax.random.uniform(kw, (in_f, out_f), jnp.float32, -bound, bound)
    b = jax.random.uniform(kb, (1, out_f), jnp.float32, -bound, bound)
    return w, b


def _reference(x, w1, b1, w2, b2, w3, b3):
    h = jnp.maximum(x @ w1 + b1, 0.0)
    h = jnp.maximum(h @ w2 + b2, 0.0)
    return h @ w3 + b3


if __name__ == "__main__":
    key = jax.random.PRNGKey(0)
    kx, k1, k2, k3, kx2 = jax.random.split(key, 5)

    w1, b1 = init_linear(k1, I_DIM, H1)
    w2, b2 = init_linear(k2, H1, H2)
    w3, b3 = init_linear(k3, H2, O_DIM)

    # Pad + cast the parameters once (not per forward call).
    params = jax.tree.map(jax.block_until_ready,
                          prepare_params(w1, b1, w2, b2, w3, b3))

    # Small batch (matches the module's typical use): single grid step.
    B = 8
    x = jax.random.normal(kx, (B, I_DIM), jnp.float32)
    out = jax.block_until_ready(mlp_forward(x, params))
    ref = _reference(x, w1, b1, w2, b2, w3, b3)
    assert out.shape == (B, O_DIM)
    # bf16 matmul inputs with f32 accumulation -> relaxed tolerance vs f32 reference.
    assert jnp.allclose(out, ref, atol=3e-2, rtol=3e-2), "mismatch vs reference (B=8)"

    # Non-multiple batch: exercises the batch grid (multiple tiles, batch padding,
    # weights resident across steps).
    B2 = 600
    x2 = jax.random.normal(kx2, (B2, I_DIM), jnp.float32)
    out2 = jax.block_until_ready(mlp_forward(x2, params))
    ref2 = _reference(x2, w1, b1, w2, b2, w3, b3)
    assert out2.shape == (B2, O_DIM)
    assert jnp.allclose(out2, ref2, atol=3e-2, rtol=3e-2), "mismatch vs reference (B=600)"

    print("KERNEL_OK")
</pallas_src>

<mosaic_0001>
module attributes {stable_mosaic.version = 11 : i64} {
  func.func @mlp_kernel(%arg0: i32, %arg1: memref<16x320xf32, #tpu.memory_space<vmem>>, %arg2: memref<320x256xbf16, #tpu.memory_space<vmem>>, %arg3: memref<1x256xf32, #tpu.memory_space<vmem>>, %arg4: memref<256x128xbf16, #tpu.memory_space<vmem>>, %arg5: memref<1x128xf32, #tpu.memory_space<vmem>>, %arg6: memref<128x8xbf16, #tpu.memory_space<vmem>>, %arg7: memref<1x8xf32, #tpu.memory_space<vmem>>, %arg8: memref<16x8xf32, #tpu.memory_space<vmem>>) attributes {dimension_semantics = [#tpu.dimension_semantics<parallel>], iteration_bounds = array<i64: 1>, scalar_prefetch = 0 : i64, scratch_operands = 0 : i64, tpu.core_type = #tpu.core_type<tc>, window_params = [{transform_indices = @transform_0, window_bounds = array<i64: 16, 320>}, {pipeline_mode = #tpu.pipeline_mode<synchronous>, transform_indices = @transform_1, window_bounds = array<i64: 320, 256>}, {pipeline_mode = #tpu.pipeline_mode<synchronous>, transform_indices = @transform_2, window_bounds = array<i64: 1, 256>}, {pipeline_mode = #tpu.pipeline_mode<synchronous>, transform_indices = @transform_3, window_bounds = array<i64: 256, 128>}, {pipeline_mode = #tpu.pipeline_mode<synchronous>, transform_indices = @transform_4, window_bounds = array<i64: 1, 128>}, {pipeline_mode = #tpu.pipeline_mode<synchronous>, transform_indices = @transform_5, window_bounds = array<i64: 128, 8>}, {pipeline_mode = #tpu.pipeline_mode<synchronous>, transform_indices = @transform_6, window_bounds = array<i64: 1, 8>}, {transform_indices = @transform_7, window_bounds = array<i64: 16, 8>}]} {
    %c0 = arith.constant 0 : index
    %c0_0 = arith.constant 0 : index
    %0 = vector.load %arg1[%c0, %c0_0] : memref<16x320xf32, #tpu.memory_space<vmem>>, vector<16x320xf32>
    %1 = arith.truncf %0 : vector<16x320xf32> to vector<16x320xbf16>
    %c0_1 = arith.constant 0 : index
    %c0_2 = arith.constant 0 : index
    %2 = vector.load %arg2[%c0_1, %c0_2] : memref<320x256xbf16, #tpu.memory_space<vmem>>, vector<320x256xbf16>
    %cst = arith.constant dense<0.000000e+00> : vector<16x256xf32>
    %3 = tpu.matmul %1, %2, %cst {dimension_numbers = #tpu.dot_dimension_numbers<[1], [0], [0], [1], [0, 0, 1, 1], [], []>} : vector<16x320xbf16>, vector<320x256xbf16>, vector<16x256xf32> -> vector<16x256xf32>
    %c0_3 = arith.constant 0 : index
    %c0_4 = arith.constant 0 : index
    %4 = vector.load %arg3[%c0_3, %c0_4] : memref<1x256xf32, #tpu.memory_space<vmem>>, vector<1x256xf32>
    %5 = vector.broadcast %4 : vector<1x256xf32> to vector<16x256xf32>
    %6 = arith.addf %3, %5 : vector<16x256xf32>
    %cst_5 = arith.constant 0.000000e+00 : f32
    %7 = vector.broadcast %cst_5 : f32 to vector<16x256xf32>
    %8 = arith.maximumf %6, %7 : vector<16x256xf32>
    %9 = arith.truncf %8 : vector<16x256xf32> to vector<16x256xbf16>
    %c0_6 = arith.constant 0 : index
    %c0_7 = arith.constant 0 : index
    %10 = vector.load %arg4[%c0_6, %c0_7] : memref<256x128xbf16, #tpu.memory_space<vmem>>, vector<256x128xbf16>
    %cst_8 = arith.constant dense<0.000000e+00> : vector<16x128xf32>
    %11 = tpu.matmul %9, %10, %cst_8 {dimension_numbers = #tpu.dot_dimension_numbers<[1], [0], [0], [1], [0, 0, 1, 1], [], []>} : vector<16x256xbf16>, vector<256x128xbf16>, vector<16x128xf32> -> vector<16x128xf32>
    %c0_9 = arith.constant 0 : index
    %c0_10 = arith.constant 0 : index
    %12 = vector.load %arg5[%c0_9, %c0_10] : memref<1x128xf32, #tpu.memory_space<vmem>>, vector<1x128xf32>
    %13 = vector.broadcast %12 : vector<1x128xf32> to vector<16x128xf32>
    %14 = arith.addf %11, %13 : vector<16x128xf32>
    %cst_11 = arith.constant 0.000000e+00 : f32
    %15 = vector.broadcast %cst_11 : f32 to vector<16x128xf32>
    %16 = arith.maximumf %14, %15 : vector<16x128xf32>
    %17 = arith.truncf %16 : vector<16x128xf32> to vector<16x128xbf16>
    %c0_12 = arith.constant 0 : index
    %c0_13 = arith.constant 0 : index
    %18 = vector.load %arg6[%c0_12, %c0_13] : memref<128x8xbf16, #tpu.memory_space<vmem>>, vector<128x8xbf16>
    %cst_14 = arith.constant dense<0.000000e+00> : vector<16x8xf32>
    %19 = tpu.matmul %17, %18, %cst_14 {dimension_numbers = #tpu.dot_dimension_numbers<[1], [0], [0], [1], [0, 0, 1, 1], [], []>} : vector<16x128xbf16>, vector<128x8xbf16>, vector<16x8xf32> -> vector<16x8xf32>
    %c0_15 = arith.constant 0 : index
    %c0_16 = arith.constant 0 : index
    %20 = vector.load %arg7[%c0_15, %c0_16] : memref<1x8xf32, #tpu.memory_space<vmem>>, vector<1x8xf32>
    %21 = vector.broadcast %20 : vector<1x8xf32> to vector<16x8xf32>
    %22 = arith.addf %19, %21 : vector<16x8xf32>
    %c0_17 = arith.constant 0 : index
    %c0_18 = arith.constant 0 : index
    %23 = vector.load %arg8[%c0_17, %c0_18] : memref<16x8xf32, #tpu.memory_space<vmem>>, vector<16x8xf32>
    tpu.vector_store %arg8[%c0_17, %c0_18], %22 {strides = array<i32>} : memref<16x8xf32, #tpu.memory_space<vmem>>, vector<16x8xf32>,
    return
  }
  func.func @transform_0(%arg0: i32) -> (i32, i32) {
    %c0_i32 = arith.constant 0 : i32
    %c0_i32_0 = arith.constant 0 : i32
    return %arg0, %c0_i32 : i32, i32
  }
  func.func @transform_1(%arg0: i32) -> (i32, i32) {
    %c0_i32 = arith.constant 0 : i32
    %c0_i32_0 = arith.constant 0 : i32
    %c0_i32_1 = arith.constant 0 : i32
    return %c0_i32, %c0_i32_0 : i32, i32
  }
  func.func @transform_2(%arg0: i32) -> (i32, i32) {
    %c0_i32 = arith.constant 0 : i32
    %c0_i32_0 = arith.constant 0 : i32
    %c0_i32_1 = arith.constant 0 : i32
    return %c0_i32, %c0_i32_0 : i32, i32
  }
  func.func @transform_3(%arg0: i32) -> (i32, i32) {
    %c0_i32 = arith.constant 0 : i32
    %c0_i32_0 = arith.constant 0 : i32
    %c0_i32_1 = arith.constant 0 : i32
    return %c0_i32, %c0_i32_0 : i32, i32
  }
  func.func @transform_4(%arg0: i32) -> (i32, i32) {
    %c0_i32 = arith.constant 0 : i32
    %c0_i32_0 = arith.constant 0 : i32
    %c0_i32_1 = arith.constant 0 : i32
    return %c0_i32, %c0_i32_0 : i32, i32
  }
  func.func @transform_5(%arg0: i32) -> (i32, i32) {
    %c0_i32 = arith.constant 0 : i32
    %c0_i32_0 = arith.constant 0 : i32
    %c0_i32_1 = arith.constant 0 : i32
    return %c0_i32, %c0_i32_0 : i32, i32
  }
  func.func @transform_6(%arg0: i32) -> (i32, i32) {
    %c0_i32 = arith.constant 0 : i32
    %c0_i32_0 = arith.constant 0 : i32
    %c0_i32_1 = arith.constant 0 : i32
    return %c0_i32, %c0_i32_0 : i32, i32
  }
  func.func @transform_7(%arg0: i32) -> (i32, i32) {
    %c0_i32 = arith.constant 0 : i32
    %c0_i32_0 = arith.constant 0 : i32
    return %arg0, %c0_i32 : i32, i32
  }
}

</mosaic_0001>

<llo_original>
// kernel: tpu_custom_call.1
$region0: #{tpu_custom_call.1}
  #allocation0 [shape = 'u32[]', space=smem, size = 0x4, offset = 0x4, fixed_abs, tag = 'smem constant byte address 0x4 - core index']
  #allocation1 [shape = 'u32[144,128]{1,0:T(1,128)}', space=vmem, size = 0x12000, scoped, tag = 'internal scratch']
  %s0 = inlined_call_operand.vmem [shape: f32[16,320], index: 0, kind: input, shape index: {}]
  %s1 = inlined_call_operand.hbm [shape: bf16[320,256], index: 1, kind: input, shape index: {}]
  %s2 = inlined_call_operand.vmem [shape: f32[1,256], index: 2, kind: input, shape index: {}]
  %s3 = inlined_call_operand.hbm [shape: bf16[256,128], index: 3, kind: input, shape index: {}]
  %s4 = inlined_call_operand.vmem [shape: f32[1,128], index: 4, kind: input, shape index: {}]
  %s5 = inlined_call_operand.vmem [shape: bf16[128,8], index: 5, kind: input, shape index: {}]
  %s6 = inlined_call_operand.vmem [shape: f32[1,8], index: 6, kind: input, shape index: {}]
  %s7 = inlined_call_operand.vmem [shape: f32[16,8], index: 7, kind: output, shape index: {}]
  %s8 = sld [smem:[#allocation0]]
  $region46: #{tpu_custom_call.1} parent=0
    _
  %s10 = ssub.s32 1, %s8
  %s11 = scalar_select 0, %s10, %s8
  $region1: #{tpu_custom_call.1} parent=0
    #allocation2 [shape = 'u8[163840]{0}', space=vmem, size = 0x28000, scoped, tag = 'input window, operand 1, single buffered']
    #allocation3 [shape = 's32[1]{0}', space=sflag, size = 0x4, scoped, tag = 'scoped memory for tpu_custom_call.1']
    #allocation4 [shape = 'u8[65536]{0}', space=vmem, size = 0x10000, scoped, tag = 'input window, operand 3, single buffered']
    #allocation5 [shape = 's32[1]{0}', space=sflag, size = 0x4, scoped, tag = 'scoped memory for tpu_custom_call.1']
    %12 = vsyncpa [#allocation3], 0
    %13 = vsyncpa [#allocation5], 0
    // Predicated region
    $region2: #{tpu_custom_call.1} parent=1 // pred_check
      _
    $region3: #{tpu_custom_call.1} parent=1 // pred_check_branch
      %15 = sbr.rel (0) target = $region5
    $region4: #{tpu_custom_call.1} parent=1 // pred_region
      _
    $region5: #{tpu_custom_call.1} parent=1 // pred_fallthru
      _
    // Predicated region
    $region6: #{tpu_custom_call.1} parent=1 // pred_check
      _
    $region7: #{tpu_custom_call.1} parent=1 // pred_check_branch
      %17 = sbr.rel (0) target = $region9
    $region8: #{tpu_custom_call.1} parent=1 // pred_region
      %s19 = ssub.s32 5120, 5120
      %20 = vsyncadd [#allocation3], %s19
      %s21 = sshll.u32 [#allocation2], 4
      %s22 = int_to_ptr.vmem [resolvable:$true] %s21
      %27 = dma.hbm_to_vmem [thread:$0]  %s1, 5120, %s22, [#allocation3], 128, 128, 8
    $region9: #{tpu_custom_call.1} parent=1 // pred_fallthru
      _
    // Predicated region
    $region10: #{tpu_custom_call.1} parent=1 // pred_check
      _
    $region11: #{tpu_custom_call.1} parent=1 // pred_check_branch
      %29 = sbr.rel (0) target = $region13
    $region12: #{tpu_custom_call.1} parent=1 // pred_region
      _
    $region13: #{tpu_custom_call.1} parent=1 // pred_fallthru
      _
    // Predicated region
    $region14: #{tpu_custom_call.1} parent=1 // pred_check
      _
    $region15: #{tpu_custom_call.1} parent=1 // pred_check_branch
      %31 = sbr.rel (0) target = $region17
    $region16: #{tpu_custom_call.1} parent=1 // pred_region
      %s33 = ssub.s32 2048, 2048
      %34 = vsyncadd [#allocation5], %s33
      %s35 = sshll.u32 [#allocation4], 4
      %s36 = int_to_ptr.vmem [resolvable:$true] %s35
      %41 = dma.hbm_to_vmem [thread:$0]  %s3, 2048, %s36, [#allocation5], 64, 64, 4
    $region17: #{tpu_custom_call.1} parent=1 // pred_fallthru
      _
    // Predicated region
    $region18: #{tpu_custom_call.1} parent=1 // pred_check
      _
    $region19: #{tpu_custom_call.1} parent=1 // pred_check_branch
      %43 = sbr.rel (0) target = $region21
    $region20: #{tpu_custom_call.1} parent=1 // pred_region
      _
    $region21: #{tpu_custom_call.1} parent=1 // pred_fallthru
      _
    // Predicated region
    $region22: #{tpu_custom_call.1} parent=1 // pred_check
      _
    $region23: #{tpu_custom_call.1} parent=1 // pred_check_branch
      %45 = sbr.rel (0) target = $region25
    $region24: #{tpu_custom_call.1} parent=1 // pred_region
      _
    $region25: #{tpu_custom_call.1} parent=1 // pred_fallthru
      _
    // Predicated region
    $region26: #{tpu_custom_call.1} parent=1 // pred_check
      _
    $region27: #{tpu_custom_call.1} parent=1 // pred_check_branch
      %47 = sbr.rel (0) target = $region29
    $region28: #{tpu_custom_call.1} parent=1 // pred_region
      _
    $region29: #{tpu_custom_call.1} parent=1 // pred_fallthru
      _
    // Predicated region
    $region30: #{tpu_custom_call.1} parent=1 // pred_check
      _
    $region31: #{tpu_custom_call.1} parent=1 // pred_check_branch
      %49 = sbr.rel (0) target = $region33
    $region32: #{tpu_custom_call.1} parent=1 // pred_region
      %50 = dma.done [#allocation3], 5120
    $region33: #{tpu_custom_call.1} parent=1 // pred_fallthru
      _
    // Predicated region
    $region34: #{tpu_custom_call.1} parent=1 // pred_check
      _
    $region35: #{tpu_custom_call.1} parent=1 // pred_check_branch
      %52 = sbr.rel (0) target = $region37
    $region36: #{tpu_custom_call.1} parent=1 // pred_region
      %53 = dma.done [#allocation5], 2048
    $region37: #{tpu_custom_call.1} parent=1 // pred_fallthru
      _
    %v55 = vld [vmem:[%s0] sm:$0xff]
    %v56 = vld [vmem:[%s0 + $0x8] sm:$0xff]
    %v57 = vld [vmem:[%s0 + $0x10] sm:$0xff]
    %v58 = vld [vmem:[%s0 + $0x18] sm:$0xff]
    %v59 = vld [vmem:[%s0 + $0x20] sm:$0xff]
    %v60 = vld [vmem:[%s0 + $0x28] sm:$0xff]
    %v61 = vpack.c.bf16 %v58, %v55
    %v62 = vpack.c.bf16 %v59, %v56
    %v63 = vpack.c.bf16 %v60, %v57
    %v64 = vld [vmem:[#allocation2] sm:$0xff]
    %v65 = vld [vmem:[#allocation2 + $0x8] sm:$0xff]
    %v66 = vld [vmem:[#allocation2 + $0x10] sm:$0xff]
    %v67 = vld [vmem:[#allocation2 + $0x18] sm:$0xff]
    %v68 = vld [vmem:[#allocation2 + $0x20] sm:$0xff]
    %v69 = vld [vmem:[#allocation2 + $0x28] sm:$0xff]
    %v70 = vld [vmem:[#allocation2 + $0x30] sm:$0xff]
    %v71 = vld [vmem:[#allocation2 + $0x38] sm:$0xff]
    %v72 = vld [vmem:[#allocation2 + $0x40] sm:$0xff]
    %v73 = vld [vmem:[#allocation2 + $0x48] sm:$0xff]
    %v74 = vld [vmem:[#allocation2 + $0x50] sm:$0xff]
    %v75 = vld [vmem:[#allocation2 + $0x58] sm:$0xff]
    %v76 = vld [vmem:[#allocation2 + $0x60] sm:$0xff]
    %v77 = vld [vmem:[#allocation2 + $0x68] sm:$0xff]
    %v78 = vld [vmem:[#allocation2 + $0x70] sm:$0xff]
    %v79 = vld [vmem:[#allocation2 + $0x78] sm:$0xff]
    %v80 = vld [vmem:[#allocation2 + $0x80] sm:$0xff]
    %v81 = vld [vmem:[#allocation2 + $0x88] sm:$0xff]
    %v82 = vld [vmem:[#allocation2 + $0x90] sm:$0xff]
    %v83 = vld [vmem:[#allocation2 + $0x98] sm:$0xff]
    %v84 = vld [vmem:[#allocation2 + $0xa0] sm:$0xff]
    %v85 = vld [vmem:[#allocation2 + $0xa8] sm:$0xff]
    %v86 = vld [vmem:[#allocation2 + $0xb0] sm:$0xff]
    %v87 = vld [vmem:[#allocation2 + $0xb8] sm:$0xff]
    %v88 = vld [vmem:[#allocation2 + $0xc0] sm:$0xff]
    %v89 = vld [vmem:[#allocation2 + $0xc8] sm:$0xff]
    %v90 = vld [vmem:[#allocation2 + $0xd0] sm:$0xff]
    %v91 = vld [vmem:[#allocation2 + $0xd8] sm:$0xff]
    %v92 = vld [vmem:[#allocation2 + $0xe0] sm:$0xff]
    %v93 = vld [vmem:[#allocation2 + $0xe8] sm:$0xff]
    %v94 = vld [vmem:[#allocation2 + $0xf0] sm:$0xff]
    %v95 = vld [vmem:[#allocation2 + $0xf8] sm:$0xff]
    %v96 = vld [vmem:[#allocation2 + $0x100] sm:$0xff]
    %v97 = vld [vmem:[#allocation2 + $0x108] sm:$0xff]
    %v98 = vld [vmem:[#allocation2 + $0x110] sm:$0xff]
    %v99 = vld [vmem:[#allocation2 + $0x118] sm:$0xff]
    %v100 = vld [vmem:[#allocation2 + $0x120] sm:$0xff]
    %v101 = vld [vmem:[#allocation2 + $0x128] sm:$0xff]
    %v102 = vld [vmem:[#allocation2 + $0x130] sm:$0xff]
    %v103 = vld [vmem:[#allocation2 + $0x138] sm:$0xff]
    %v104 = vld [vmem:[%s2] sm:$0x3]
    %v106 = vlaneseq
    %v107 = vshrl.u32 %v106, 7
    %v108 = vsub.s32 0, %v107
    %v109 = vrot.slane %v104, %v108
    %v110 = vlaneseq
    %v111 = vshrl.u32 %v110, 7
    %v112 = vsub.s32 1, %v111
    %v113 = vrot.slane %v104, %v112
    %v156 = vunpack.c.l.b16 %v64
    %v157 = vunpack.c.h.b16 %v64
    %v158 = vunpack.c.l.b16 %v65
    %v159 = vunpack.c.h.b16 %v65
    %v160 = vunpack.c.l.b16 %v66
    %v161 = vunpack.c.h.b16 %v66
    %v162 = vunpack.c.l.b16 %v67
    %v163 = vunpack.c.h.b16 %v67
    %v164 = vunpack.c.l.b16 %v68
    %v165 = vunpack.c.h.b16 %v68
    %v166 = vunpack.c.l.b16 %v69
    %v167 = vunpack.c.h.b16 %v69
    %v168 = vunpack.c.l.b16 %v70
    %v169 = vunpack.c.h.b16 %v70
    %v170 = vunpack.c.l.b16 %v71
    %v171 = vunpack.c.h.b16 %v71
    %v172 = vunpack.c.l.b16 %v72
    %v173 = vunpack.c.h.b16 %v72
    %v174 = vunpack.c.l.b16 %v73
    %v175 = vunpack.c.h.b16 %v73
    %v176 = vunpack.c.l.b16 %v74
    %v177 = vunpack.c.h.b16 %v74
    %v178 = vunpack.c.l.b16 %v75
    %v179 = vunpack.c.h.b16 %v75
    %v180 = vunpack.c.l.b16 %v76
    %v181 = vunpack.c.h.b16 %v76
    %v182 = vunpack.c.l.b16 %v77
    %v183 = vunpack.c.h.b16 %v77
    %v184 = vunpack.c.l.b16 %v78
    %v185 = vunpack.c.h.b16 %v78
    %v186 = vunpack.c.l.b16 %v79
    %v187 = vunpack.c.h.b16 %v79
    %v188 = vunpack.c.l.b16 %v80
    %v189 = vunpack.c.h.b16 %v80
    %v190 = vunpack.c.l.b16 %v81
    %v191 = vunpack.c.h.b16 %v81
    %v192 = vunpack.c.l.b16 %v82
    %v193 = vunpack.c.h.b16 %v82
    %v194 = vunpack.c.l.b16 %v83
    %v195 = vunpack.c.h.b16 %v83
    %v196 = vunpack.c.l.b16 %v84
    %v197 = vunpack.c.h.b16 %v84
    %v198 = vunpack.c.l.b16 %v85
    %v199 = vunpack.c.h.b16 %v85
    %v200 = vunpack.c.l.b16 %v86
    %v201 = vunpack.c.h.b16 %v86
    %v202 = vunpack.c.l.b16 %v87
    %v203 = vunpack.c.h.b16 %v87
    %v204 = vunpack.c.l.b16 %v88
    %v205 = vunpack.c.h.b16 %v88
    %v206 = vunpack.c.l.b16 %v89
    %v207 = vunpack.c.h.b16 %v89
    %v208 = vunpack.c.l.b16 %v90
    %v209 = vunpack.c.h.b16 %v90
    %v210 = vunpack.c.l.b16 %v91
    %v211 = vunpack.c.h.b16 %v91
    %v212 = vunpack.c.l.b16 %v92
    %v213 = vunpack.c.h.b16 %v92
    %v214 = vunpack.c.l.b16 %v93
    %v215 = vunpack.c.h.b16 %v93
    %v216 = vunpack.c.l.b16 %v94
    %v217 = vunpack.c.h.b16 %v94
    %v218 = vunpack.c.l.b16 %v95
    %v219 = vunpack.c.h.b16 %v95
    %v220 = vunpack.c.l.b16 %v96
    %v221 = vunpack.c.h.b16 %v96
    %v222 = vunpack.c.l.b16 %v97
    %v223 = vunpack.c.h.b16 %v97
    %v224 = vunpack.c.l.b16 %v98
    %v225 = vunpack.c.h.b16 %v98
    %v226 = vunpack.c.l.b16 %v99
    %v227 = vunpack.c.h.b16 %v99
    %v228 = vunpack.c.l.b16 %v100
    %v229 = vunpack.c.h.b16 %v100
    %v230 = vunpack.c.l.b16 %v101
    %v231 = vunpack.c.h.b16 %v101
    %v232 = vunpack.c.l.b16 %v102
    %v233 = vunpack.c.h.b16 %v102
    %v234 = vunpack.c.l.b16 %v103
    %v235 = vunpack.c.h.b16 %v103
    %v236 = vpack.c.b16 %v158, %v156
    %v237 = vpack.c.b16 %v159, %v157
    %v238 = vpack.c.b16 %v162, %v160
    %v239 = vpack.c.b16 %v163, %v161
    %v240 = vpack.c.b16 %v166, %v164
    %v241 = vpack.c.b16 %v167, %v165
    %v242 = vpack.c.b16 %v170, %v168
    %v243 = vpack.c.b16 %v171, %v169
    %v244 = vpack.c.b16 %v174, %v172
    %v245 = vpack.c.b16 %v175, %v173
    %v246 = vpack.c.b16 %v178, %v176
    %v247 = vpack.c.b16 %v179, %v177
    %v248 = vpack.c.b16 %v182, %v180
    %v249 = vpack.c.b16 %v183, %v181
    %v250 = vpack.c.b16 %v186, %v184
    %v251 = vpack.c.b16 %v187, %v185
    %v252 = vpack.c.b16 %v190, %v188
    %v253 = vpack.c.b16 %v191, %v189
    %v254 = vpack.c.b16 %v194, %v192
    %v255 = vpack.c.b16 %v195, %v193
    %v256 = vpack.c.b16 %v198, %v196
    %v257 = vpack.c.b16 %v199, %v197
    %v258 = vpack.c.b16 %v202, %v200
    %v259 = vpack.c.b16 %v203, %v201
    %v260 = vpack.c.b16 %v206, %v204
    %v261 = vpack.c.b16 %v207, %v205
    %v262 = vpack.c.b16 %v210, %v208
    %v263 = vpack.c.b16 %v211, %v209
    %v264 = vpack.c.b16 %v214, %v212
    %v265 = vpack.c.b16 %v215, %v213
    %v266 = vpack.c.b16 %v218, %v216
    %v267 = vpack.c.b16 %v219, %v217
    %v268 = vpack.c.b16 %v222, %v220
    %v269 = vpack.c.b16 %v223, %v221
    %v270 = vpack.c.b16 %v226, %v224
    %v271 = vpack.c.b16 %v227, %v225
    %v272 = vpack.c.b16 %v230, %v228
    %v273 = vpack.c.b16 %v231, %v229
    %v274 = vpack.c.b16 %v234, %v232
    %v275 = vpack.c.b16 %v235, %v233
    %vm316 = vcmask 523264
    %v318 = vsel %vm316, %v63, 0
    %320 = vmatprep.subr.bf16.mxu0 %v251
    %321 = vmatpush1.bf16.msra.mxu0 %v250
    %322 = vmatprep.subr.bf16.mxu0 %v249
    %323 = vmatpush1.bf16.msra.mxu0 %v248
    %324 = vmatprep.subr.bf16.mxu0 %v247
    %325 = vmatpush1.bf16.msra.mxu0 %v246
    %326 = vmatprep.subr.bf16.mxu0 %v245
    %327 = vmatpush1.bf16.msra.mxu0 %v244
    %328 = vmatprep.subr.bf16.mxu0 %v243
    %329 = vmatpush1.bf16.msra.mxu0 %v242
    %330 = vmatprep.subr.bf16.mxu0 %v241
    %331 = vmatpush1.bf16.msra.mxu0 %v240
    %332 = vmatprep.subr.bf16.mxu0 %v239
    %333 = vmatpush1.bf16.msra.mxu0 %v238
    %334 = vmatprep.subr.bf16.mxu0 %v237
    %335 = vmatpush1.bf16.msra.mxu0 %v236
    %336 = vmatprep.subr.bf16.mxu0 %v267
    %337 = vmatpush2.bf16.msra.mxu0 %v266
    %338 = vmatprep.subr.bf16.mxu0 %v265
    %339 = vmatpush2.bf16.msra.mxu0 %v264
    %340 = vmatprep.subr.bf16.mxu0 %v263
    %341 = vmatpush2.bf16.msra.mxu0 %v262
    %342 = vmatprep.subr.bf16.mxu0 %v261
    %343 = vmatpush2.bf16.msra.mxu0 %v260
    %344 = vmatprep.subr.bf16.mxu0 %v259
    %345 = vmatpush2.bf16.msra.mxu0 %v258
    %346 = vmatprep.subr.bf16.mxu0 %v257
    %347 = vmatpush2.bf16.msra.mxu0 %v256
    %348 = vmatprep.subr.bf16.mxu0 %v255
    %349 = vmatpush2.bf16.msra.mxu0 %v254
    %350 = vmatprep.subr.bf16.mxu0 %v253
    %351 = vmatpush2.bf16.msra.mxu0 %v252
    %352 = vmatprep.mubr.bf16.mxu0 %v62
    %353 = vmatmul.mubr.bf16.gmra.mxu0 %v61
    %v354 = vpop.f32.mrf.mxu0
    %v355 = vadd.f32 %v109, %v354
    %v356 = vpop.f32.mrf.mxu0
    %v357 = vadd.f32 %v113, %v356
    %v358 = vpop.f32.mrf.mxu0
    %v359 = vadd.f32 %v109, %v358
    %v360 = vpop.f32.mrf.mxu0
    %v361 = vadd.f32 %v113, %v360
    %362 = vdwg.mxu0
    %363 = vmatprep.subr.bf16.mxu0 0
    %364 = vmatpush1.bf16.msra.mxu0 0
    %365 = vmatprep.subr.bf16.mxu0 0
    %366 = vmatpush1.bf16.msra.mxu0 0
    %367 = vmatprep.subr.bf16.mxu0 0
    %368 = vmatpush1.bf16.msra.mxu0 0
    %369 = vmatprep.subr.bf16.mxu0 0
    %370 = vmatpush1.bf16.msra.mxu0 0
    %371 = vmatprep.subr.bf16.mxu0 %v275
    %372 = vmatpush1.bf16.msra.mxu0 %v274
    %373 = vmatprep.subr.bf16.mxu0 %v273
    %374 = vmatpush1.bf16.msra.mxu0 %v272
    %375 = vmatprep.subr.bf16.mxu0 %v271
    %376 = vmatpush1.bf16.msra.mxu0 %v270
    %377 = vmatprep.subr.bf16.mxu0 %v269
    %378 = vmatpush1.bf16.msra.mxu0 %v268
    %379 = vmatprep.subr.bf16.mxu0 0
    %380 = vmatpush2.bf16.msra.mxu0 0
    %381 = vmatprep.subr.bf16.mxu0 0
    %382 = vmatpush2.bf16.msra.mxu0 0
    %383 = vmatprep.subr.bf16.mxu0 0
    %384 = vmatpush2.bf16.msra.mxu0 0
    %385 = vmatprep.subr.bf16.mxu0 0
    %386 = vmatpush2.bf16.msra.mxu0 0
    %387 = vmatprep.subr.bf16.mxu0 0
    %388 = vmatpush2.bf16.msra.mxu0 0
    %389 = vmatprep.subr.bf16.mxu0 0
    %390 = vmatpush2.bf16.msra.mxu0 0
    %391 = vmatprep.subr.bf16.mxu0 0
    %392 = vmatpush2.bf16.msra.mxu0 0
    %393 = vmatprep.subr.bf16.mxu0 0
    %394 = vmatpush2.bf16.msra.mxu0 0
    %395 = vmatprep.mubr.bf16.mxu0 0
    %396 = vmatmul.mubr.bf16.gmra.mxu0 %v318
    %v397 = vpop.f32.mrf.mxu0
    %v398 = vadd.f32 %v355, %v397
    %v399 = vpop.f32.mrf.mxu0
    %v400 = vadd.f32 %v357, %v399
    %v401 = vpop.f32.mrf.mxu0
    %v402 = vadd.f32 %v359, %v401
    %v403 = vpop.f32.mrf.mxu0
    %v404 = vadd.f32 %v361, %v403
    %405 = vdwg.mxu0
    %v406 = vmax.f32 %v398, 0.0
    %v407 = vmax.f32 %v400, 0.0
    %v408 = vmax.f32 %v402, 0.0
    %v409 = vmax.f32 %v404, 0.0
    %v410 = vpack.c.bf16 %v408, %v406
    %v411 = vpack.c.bf16 %v409, %v407
    %v412 = vld [vmem:[#allocation4] sm:$0xf]
    %v413 = vld [vmem:[#allocation4 + $0x4] sm:$0xf]
    %v414 = vld [vmem:[#allocation4 + $0x8] sm:$0xf]
    %v415 = vld [vmem:[#allocation4 + $0xc] sm:$0xf]
    %v416 = vld [vmem:[#allocation4 + $0x10] sm:$0xf]
    %v417 = vld [vmem:[#allocation4 + $0x14] sm:$0xf]
    %v418 = vld [vmem:[#allocation4 + $0x18] sm:$0xf]
    %v419 = vld [vmem:[#allocation4 + $0x1c] sm:$0xf]
    %v420 = vld [vmem:[#allocation4 + $0x20] sm:$0xf]
    %v421 = vld [vmem:[#allocation4 + $0x24] sm:$0xf]
    %v422 = vld [vmem:[#allocation4 + $0x28] sm:$0xf]
    %v423 = vld [vmem:[#allocation4 + $0x2c] sm:$0xf]
    %v424 = vld [vmem:[#allocation4 + $0x30] sm:$0xf]
    %v425 = vld [vmem:[#allocation4 + $0x34] sm:$0xf]
    %v426 = vld [vmem:[#allocation4 + $0x38] sm:$0xf]
    %v427 = vld [vmem:[#allocation4 + $0x3c] sm:$0xf]
    %v428 = vld [vmem:[#allocation4 + $0x40] sm:$0xf]
    %v429 = vld [vmem:[#allocation4 + $0x44] sm:$0xf]
    %v430 = vld [vmem:[#allocation4 + $0x48] sm:$0xf]
    %v431 = vld [vmem:[#allocation4 + $0x4c] sm:$0xf]
    %v432 = vld [vmem:[#allocation4 + $0x50] sm:$0xf]
    %v433 = vld [vmem:[#allocation4 + $0x54] sm:$0xf]
    %v434 = vld [vmem:[#allocation4 + $0x58] sm:$0xf]
    %v435 = vld [vmem:[#allocation4 + $0x5c] sm:$0xf]
    %v436 = vld [vmem:[#allocation4 + $0x60] sm:$0xf]
    %v437 = vld [vmem:[#allocation4 + $0x64] sm:$0xf]
    %v438 = vld [vmem:[#allocation4 + $0x68] sm:$0xf]
    %v439 = vld [vmem:[#allocation4 + $0x6c] sm:$0xf]
    %v440 = vld [vmem:[#allocation4 + $0x70] sm:$0xf]
    %v441 = vld [vmem:[#allocation4 + $0x74] sm:$0xf]
    %v442 = vld [vmem:[#allocation4 + $0x78] sm:$0xf]
    %v443 = vld [vmem:[#allocation4 + $0x7c] sm:$0xf]
    %v444 = vld [vmem:[%s4] sm:$0x1]
    %v446 = vlaneseq
    %v447 = vshrl.u32 %v446, 7
    %v448 = vsub.s32 0, %v447
    %v449 = vrot.slane %v444, %v448
    %v483 = vunpack.c.l.b16 %v412
    %v484 = vunpack.c.l.b16 %v413
    %v485 = vunpack.c.l.b16 %v414
    %v486 = vunpack.c.l.b16 %v415
    %v487 = vunpack.c.l.b16 %v416
    %v488 = vunpack.c.l.b16 %v417
    %v489 = vunpack.c.l.b16 %v418
    %v490 = vunpack.c.l.b16 %v419
    %v491 = vunpack.c.l.b16 %v420
    %v492 = vunpack.c.l.b16 %v421
    %v493 = vunpack.c.l.b16 %v422
    %v494 = vunpack.c.l.b16 %v423
    %v495 = vunpack.c.l.b16 %v424
    %v496 = vunpack.c.l.b16 %v425
    %v497 = vunpack.c.l.b16 %v426
    %v498 = vunpack.c.l.b16 %v427
    %v499 = vunpack.c.l.b16 %v428
    %v500 = vunpack.c.l.b16 %v429
    %v501 = vunpack.c.l.b16 %v430
    %v502 = vunpack.c.l.b16 %v431
    %v503 = vunpack.c.l.b16 %v432
    %v504 = vunpack.c.l.b16 %v433
    %v505 = vunpack.c.l.b16 %v434
    %v506 = vunpack.c.l.b16 %v435
    %v507 = vunpack.c.l.b16 %v436
    %v508 = vunpack.c.l.b16 %v437
    %v509 = vunpack.c.l.b16 %v438
    %v510 = vunpack.c.l.b16 %v439
    %v511 = vunpack.c.l.b16 %v440
    %v512 = vunpack.c.l.b16 %v441
    %v513 = vunpack.c.l.b16 %v442
    %v514 = vunpack.c.l.b16 %v443
    %v515 = vpack.c.b16 %v484, %v483
    %v516 = vpack.c.b16 %v486, %v485
    %v517 = vpack.c.b16 %v488, %v487
    %v518 = vpack.c.b16 %v490, %v489
    %v519 = vpack.c.b16 %v492, %v491
    %v520 = vpack.c.b16 %v494, %v493
    %v521 = vpack.c.b16 %v496, %v495
    %v522 = vpack.c.b16 %v498, %v497
    %v523 = vpack.c.b16 %v500, %v499
    %v524 = vpack.c.b16 %v502, %v501
    %v525 = vpack.c.b16 %v504, %v503
    %v526 = vpack.c.b16 %v506, %v505
    %v527 = vpack.c.b16 %v508, %v507
    %v528 = vpack.c.b16 %v510, %v509
    %v529 = vpack.c.b16 %v512, %v511
    %v530 = vpack.c.b16 %v514, %v513
    %547 = vmatprep.subr.bf16.mxu0 0
    %548 = vmatpush1.bf16.msra.mxu0 %v522
    %549 = vmatprep.subr.bf16.mxu0 0
    %550 = vmatpush1.bf16.msra.mxu0 %v521
    %551 = vmatprep.subr.bf16.mxu0 0
    %552 = vmatpush1.bf16.msra.mxu0 %v520
    %553 = vmatprep.subr.bf16.mxu0 0
    %554 = vmatpush1.bf16.msra.mxu0 %v519
    %555 = vmatprep.subr.bf16.mxu0 0
    %556 = vmatpush1.bf16.msra.mxu0 %v518
    %557 = vmatprep.subr.bf16.mxu0 0
    %558 = vmatpush1.bf16.msra.mxu0 %v517
    %559 = vmatprep.subr.bf16.mxu0 0
    %560 = vmatpush1.bf16.msra.mxu0 %v516
    %561 = vmatprep.subr.bf16.mxu0 0
    %562 = vmatpush1.bf16.msra.mxu0 %v515
    %563 = vmatprep.subr.bf16.mxu0 0
    %564 = vmatpush2.bf16.msra.mxu0 %v530
    %565 = vmatprep.subr.bf16.mxu0 0
    %566 = vmatpush2.bf16.msra.mxu0 %v529
    %567 = vmatprep.subr.bf16.mxu0 0
    %568 = vmatpush2.bf16.msra.mxu0 %v528
    %569 = vmatprep.subr.bf16.mxu0 0
    %570 = vmatpush2.bf16.msra.mxu0 %v527
    %571 = vmatprep.subr.bf16.mxu0 0
    %572 = vmatpush2.bf16.msra.mxu0 %v526
    %573 = vmatprep.subr.bf16.mxu0 0
    %574 = vmatpush2.bf16.msra.mxu0 %v525
    %575 = vmatprep.subr.bf16.mxu0 0
    %576 = vmatpush2.bf16.msra.mxu0 %v524
    %577 = vmatprep.subr.bf16.mxu0 0
    %578 = vmatpush2.bf16.msra.mxu0 %v523
    %579 = vmatprep.mubr.bf16.mxu0 %v411
    %580 = vmatmul.mubr.bf16.gmra.mxu0 %v410
    %v581 = vpop.f32.mrf.mxu0
    %v582 = vadd.f32 %v449, %v581
    %v583 = vpop.f32.mrf.mxu0
    %v584 = vpop.f32.mrf.mxu0
    %v585 = vadd.f32 %v449, %v584
    %v586 = vpop.f32.mrf.mxu0
    %587 = vdwg.mxu0
    %v588 = vmax.f32 %v582, 0.0
    %v589 = vmax.f32 %v585, 0.0
    %v590 = vpack.c.bf16 %v589, %v588
    %v591 = vld [vmem:[%s5] sm:$0xf]
    %v592 = vld [vmem:[%s5 + $0x4] sm:$0xf]
    %v593 = vld [vmem:[%s5 + $0x8] sm:$0xf]
    %v594 = vld [vmem:[%s5 + $0xc] sm:$0xf]
    %v595 = vld [vmem:[%s5 + $0x10] sm:$0xf]
    %v596 = vld [vmem:[%s5 + $0x14] sm:$0xf]
    %v597 = vld [vmem:[%s5 + $0x18] sm:$0xf]
    %v598 = vld [vmem:[%s5 + $0x1c] sm:$0xf]
    %v599 = vld [vmem:[%s5 + $0x20] sm:$0xf]
    %v600 = vld [vmem:[%s5 + $0x24] sm:$0xf]
    %v601 = vld [vmem:[%s5 + $0x28] sm:$0xf]
    %v602 = vld [vmem:[%s5 + $0x2c] sm:$0xf]
    %v603 = vld [vmem:[%s5 + $0x30] sm:$0xf]
    %v604 = vld [vmem:[%s5 + $0x34] sm:$0xf]
    %v605 = vld [vmem:[%s5 + $0x38] sm:$0xf]
    %v606 = vld [vmem:[%s5 + $0x3c] sm:$0xf]
    %v607 = vld [vmem:[%s6] sm:$0x1]
    %v609 = vlaneseq
    %v610 = vshrl.u32 %v609, 7
    %v611 = vsub.s32 0, %v610
    %v612 = vrot.slane %v607, %v611
    %v630 = vunpack.c.l.b16 %v591
    %v631 = vunpack.c.l.b16 %v592
    %v632 = vunpack.c.l.b16 %v593
    %v633 = vunpack.c.l.b16 %v594
    %v634 = vunpack.c.l.b16 %v595
    %v635 = vunpack.c.l.b16 %v596
    %v636 = vunpack.c.l.b16 %v597
    %v637 = vunpack.c.l.b16 %v598
    %v638 = vunpack.c.l.b16 %v599
    %v639 = vunpack.c.l.b16 %v600
    %v640 = vunpack.c.l.b16 %v601
    %v641 = vunpack.c.l.b16 %v602
    %v642 = vunpack.c.l.b16 %v603
    %v643 = vunpack.c.l.b16 %v604
    %v644 = vunpack.c.l.b16 %v605
    %v645 = vunpack.c.l.b16 %v606
    %v646 = vpack.c.b16 %v631, %v630
    %v647 = vpack.c.b16 %v633, %v632
    %v648 = vpack.c.b16 %v635, %v634
    %v649 = vpack.c.b16 %v637, %v636
    %v650 = vpack.c.b16 %v639, %v638
    %v651 = vpack.c.b16 %v641, %v640
    %v652 = vpack.c.b16 %v643, %v642
    %v653 = vpack.c.b16 %v645, %v644
    %662 = vmatprep.subr.bf16.mxu0 0
    %663 = vmatpush1.bf16.msra.mxu0 %v653
    %664 = vmatprep.subr.bf16.mxu0 0
    %665 = vmatpush1.bf16.msra.mxu0 %v652
    %666 = vmatprep.subr.bf16.mxu0 0
    %667 = vmatpush1.bf16.msra.mxu0 %v651
    %668 = vmatprep.subr.bf16.mxu0 0
    %669 = vmatpush1.bf16.msra.mxu0 %v650
    %670 = vmatprep.subr.bf16.mxu0 0
    %671 = vmatpush1.bf16.msra.mxu0 %v649
    %672 = vmatprep.subr.bf16.mxu0 0
    %673 = vmatpush1.bf16.msra.mxu0 %v648
    %674 = vmatprep.subr.bf16.mxu0 0
    %675 = vmatpush1.bf16.msra.mxu0 %v647
    %676 = vmatprep.subr.bf16.mxu0 0
    %677 = vmatpush1.bf16.msra.mxu0 %v646
    %678 = vmatprep.subr.bf16.mxu0 0
    %679 = vmatpush2.bf16.msra.mxu0 0
    %680 = vmatprep.subr.bf16.mxu0 0
    %681 = vmatpush2.bf16.msra.mxu0 0
    %682 = vmatprep.subr.bf16.mxu0 0
    %683 = vmatpush2.bf16.msra.mxu0 0
    %684 = vmatprep.subr.bf16.mxu0 0
    %685 = vmatpush2.bf16.msra.mxu0 0
    %686 = vmatprep.subr.bf16.mxu0 0
    %687 = vmatpush2.bf16.msra.mxu0 0
    %688 = vmatprep.subr.bf16.mxu0 0
    %689 = vmatpush2.bf16.msra.mxu0 0
    %690 = vmatprep.subr.bf16.mxu0 0
    %691 = vmatpush2.bf16.msra.mxu0 0
    %692 = vmatprep.subr.bf16.mxu0 0
    %693 = vmatpush2.bf16.msra.mxu0 0
    %694 = vmatprep.mubr.bf16.mxu0 0
    %695 = vmatmul.mubr.bf16.gmra.mxu0 %v590
    %v696 = vpop.f32.mrf.mxu0
    %v697 = vadd.f32 %v612, %v696
    %v698 = vpop.f32.mrf.mxu0
    %v699 = vpop.f32.mrf.mxu0
    %v700 = vadd.f32 %v612, %v699
    %v701 = vpop.f32.mrf.mxu0
    %702 = vdwg.mxu0
    %vm703 = vcmask 64512
    %704 = vst.msk [vmem:[%s7] sm:$0xff] %vm703, %v697
    %705 = vst.msk [vmem:[%s7 + $0x8] sm:$0xff] %vm703, %v700
    // Predicated region
    $region38: #{tpu_custom_call.1} parent=1 // pred_check
      _
    $region39: #{tpu_custom_call.1} parent=1 // pred_check_branch
      %707 = sbr.rel (0) target = $region41
    $region40: #{tpu_custom_call.1} parent=1 // pred_region
      _
    $region41: #{tpu_custom_call.1} parent=1 // pred_fallthru
      _
    // Predicated region
    $region42: #{tpu_custom_call.1} parent=1 // pred_check
      _
    $region43: #{tpu_custom_call.1} parent=1 // pred_check_branch
      %709 = sbr.rel (0) target = $region45
    $region44: #{tpu_custom_call.1} parent=1 // pred_region
      _
    $region45: #{tpu_custom_call.1} parent=1 // pred_fallthru
      _
    %710 = vsyncpa [#allocation3], 1
    %711 = vsyncpa [#allocation5], 1

</llo_original>
